<compile_context>
chip_gen: v5e
topology: v5e:2x2
jax: 0.10.0
libtpu: 0.0.40
codegen_flags: <defaults>
</compile_context>

<pallas_src>
import jax
import jax.numpy as jnp
from jax.experimental import pallas as pl
from jax.experimental.pallas import tpu as pltpu

IN1, OUT1, OUT2 = 123, 253, 512      # true feature dims (PyTorch module)
IN1_P, OUT1_P = 128, 256             # lane-padded feature dims (multiples of 128)
MAX_TB = 1024                        # batch-tile cap: safe under default scoped VMEM


def _round_up(n, m):
    return ((n + m - 1) // m) * m


def mlp_kernel(x_ref, w1_ref, b1_ref, w2_ref, b2_ref, o_ref):
    # x: (TB, 128), w1: (128, 256), b1: (1, 256), w2: (256, 512), b2: (1, 512)
    h = jnp.dot(x_ref[...], w1_ref[...], preferred_element_type=jnp.float32) + b1_ref[...]
    y = jnp.dot(h, w2_ref[...], preferred_element_type=jnp.float32) + b2_ref[...]
    o_ref[...] = y.astype(o_ref.dtype)


def mlp_forward(x, w1, b1, w2, b2):
    """x: (B, 123) f32; w1: (123, 253); b1: (253,); w2: (253, 512); b2: (512,)."""
    B = x.shape[0]
    TB = min(_round_up(B, 8), MAX_TB)          # batch tile (multiple of 8 sublanes)
    B_pad = _round_up(B, TB)                   # pad batch to a whole number of tiles

    # Zero-pad to lane-aligned shapes (exact: padded rows/cols are zero).
    x_p = jnp.zeros((B_pad, IN1_P), x.dtype).at[:B, :IN1].set(x)
    w1_p = jnp.zeros((IN1_P, OUT1_P), w1.dtype).at[:IN1, :OUT1].set(w1)
    b1_p = jnp.zeros((1, OUT1_P), b1.dtype).at[0, :OUT1].set(b1)
    w2_p = jnp.zeros((OUT1_P, OUT2), w2.dtype).at[:OUT1, :].set(w2)
    b2_p = b2.reshape(1, OUT2)

    grid = (B_pad // TB,)
    flops = 2 * B_pad * (IN1_P * OUT1_P + OUT1_P * OUT2)
    bytes_accessed = 4 * (
        B_pad * IN1_P                          # x in
        + IN1_P * OUT1_P + OUT1_P              # w1 + b1
        + OUT1_P * OUT2 + OUT2                 # w2 + b2
        + B_pad * OUT2                         # out
    )

    out = pl.pallas_call(
        mlp_kernel,
        out_shape=jax.ShapeDtypeStruct((B_pad, OUT2), x.dtype),
        grid=grid,
        in_specs=[
            pl.BlockSpec((TB, IN1_P), lambda i: (i, 0)),       # x: streamed over batch
            pl.BlockSpec((IN1_P, OUT1_P), lambda i: (0, 0)),   # w1: resident
            pl.BlockSpec((1, OUT1_P), lambda i: (0, 0)),       # b1: resident
            pl.BlockSpec((OUT1_P, OUT2), lambda i: (0, 0)),    # w2: resident
            pl.BlockSpec((1, OUT2), lambda i: (0, 0)),         # b2: resident
        ],
        out_specs=pl.BlockSpec((TB, OUT2), lambda i: (i, 0)),  # lane-dense 512-wide stores
        compiler_params=pltpu.CompilerParams(
            dimension_semantics=("parallel",),                 # shard batch grid across TCs (v7x)
            vmem_limit_bytes=32 * 1024 * 1024,
        ),
        cost_estimate=pl.CostEstimate(
            flops=flops, transcendentals=0, bytes_accessed=bytes_accessed),
    )(x_p, w1_p, b1_p, w2_p, b2_p)

    return out[:B]


def init_params(key):
    """Deterministic param init matching nn.Linear shapes (weight stored (out, in),
    transposed to (in, out) for the kernel)."""
    k1, k2, k3, k4 = jax.random.split(key, 4)
    lim1 = 1.0 / jnp.sqrt(jnp.float32(IN1))
    lim2 = 1.0 / jnp.sqrt(jnp.float32(OUT1))
    w1_t = jax.random.uniform(k1, (OUT1, IN1), jnp.float32, -lim1, lim1)   # (out, in)
    b1 = jax.random.uniform(k2, (OUT1,), jnp.float32, -lim1, lim1)
    w2_t = jax.random.uniform(k3, (OUT2, OUT1), jnp.float32, -lim2, lim2)  # (out, in)
    b2 = jax.random.uniform(k4, (OUT2,), jnp.float32, -lim2, lim2)
    return w1_t.T, b1, w2_t.T, b2                                           # (in, out)


if __name__ == "__main__":
    key = jax.random.PRNGKey(0)
    kx, kp = jax.random.split(key)
    B = 8
    x = jax.random.normal(kx, (B, IN1), jnp.float32)
    w1, b1, w2, b2 = init_params(kp)

    out = jax.jit(mlp_forward)(x, w1, b1, w2, b2)
    out = jax.block_until_ready(out)

    # reference check in plain JAX
    ref = (x @ w1 + b1) @ w2 + b2
    assert out.shape == (B, OUT2)
    assert jnp.allclose(out, ref, atol=1e-4, rtol=1e-4)

    print("KERNEL_OK")
</pallas_src>

<mosaic_0001>
module attributes {stable_mosaic.version = 11 : i64} {
  func.func @mlp_kernel(%arg0: i32, %arg1: memref<8x128xf32, #tpu.memory_space<vmem>>, %arg2: memref<128x256xf32, #tpu.memory_space<vmem>>, %arg3: memref<1x256xf32, #tpu.memory_space<vmem>>, %arg4: memref<256x512xf32, #tpu.memory_space<vmem>>, %arg5: memref<1x512xf32, #tpu.memory_space<vmem>>, %arg6: memref<8x512xf32, #tpu.memory_space<vmem>>) attributes {dimension_semantics = [#tpu.dimension_semantics<parallel>], iteration_bounds = array<i64: 1>, scalar_prefetch = 0 : i64, scratch_operands = 0 : i64, tpu.core_type = #tpu.core_type<tc>, window_params = [{transform_indices = @transform_0, window_bounds = array<i64: 8, 128>}, {pipeline_mode = #tpu.pipeline_mode<synchronous>, transform_indices = @transform_1, window_bounds = array<i64: 128, 256>}, {pipeline_mode = #tpu.pipeline_mode<synchronous>, transform_indices = @transform_2, window_bounds = array<i64: 1, 256>}, {pipeline_mode = #tpu.pipeline_mode<synchronous>, transform_indices = @transform_3, window_bounds = array<i64: 256, 512>}, {pipeline_mode = #tpu.pipeline_mode<synchronous>, transform_indices = @transform_4, window_bounds = array<i64: 1, 512>}, {transform_indices = @transform_5, window_bounds = array<i64: 8, 512>}]} {
    %c0 = arith.constant 0 : index
    %c0_0 = arith.constant 0 : index
    %0 = vector.load %arg1[%c0, %c0_0] : memref<8x128xf32, #tpu.memory_space<vmem>>, vector<8x128xf32>
    %c0_1 = arith.constant 0 : index
    %c0_2 = arith.constant 0 : index
    %1 = vector.load %arg2[%c0_1, %c0_2] : memref<128x256xf32, #tpu.memory_space<vmem>>, vector<128x256xf32>
    %cst = arith.constant dense<0.000000e+00> : vector<8x256xf32>
    %2 = tpu.matmul %0, %1, %cst {dimension_numbers = #tpu.dot_dimension_numbers<[1], [0], [0], [1], [0, 0, 1, 1], [], []>} : vector<8x128xf32>, vector<128x256xf32>, vector<8x256xf32> -> vector<8x256xf32>
    %c0_3 = arith.constant 0 : index
    %c0_4 = arith.constant 0 : index
    %3 = vector.load %arg3[%c0_3, %c0_4] : memref<1x256xf32, #tpu.memory_space<vmem>>, vector<1x256xf32>
    %4 = vector.broadcast %3 : vector<1x256xf32> to vector<8x256xf32>
    %5 = arith.addf %2, %4 : vector<8x256xf32>
    %c0_5 = arith.constant 0 : index
    %c0_6 = arith.constant 0 : index
    %6 = vector.load %arg4[%c0_5, %c0_6] : memref<256x512xf32, #tpu.memory_space<vmem>>, vector<256x512xf32>
    %cst_7 = arith.constant dense<0.000000e+00> : vector<8x512xf32>
    %7 = tpu.matmul %5, %6, %cst_7 {dimension_numbers = #tpu.dot_dimension_numbers<[1], [0], [0], [1], [0, 0, 1, 1], [], []>} : vector<8x256xf32>, vector<256x512xf32>, vector<8x512xf32> -> vector<8x512xf32>
    %c0_8 = arith.constant 0 : index
    %c0_9 = arith.constant 0 : index
    %8 = vector.load %arg5[%c0_8, %c0_9] : memref<1x512xf32, #tpu.memory_space<vmem>>, vector<1x512xf32>
    %9 = vector.broadcast %8 : vector<1x512xf32> to vector<8x512xf32>
    %10 = arith.addf %7, %9 : vector<8x512xf32>
    %c0_10 = arith.constant 0 : index
    %c0_11 = arith.constant 0 : index
    %11 = vector.load %arg6[%c0_10, %c0_11] : memref<8x512xf32, #tpu.memory_space<vmem>>, vector<8x512xf32>
    tpu.vector_store %arg6[%c0_10, %c0_11], %10 {strides = array<i32>} : memref<8x512xf32, #tpu.memory_space<vmem>>, vector<8x512xf32>,
    return
  }
  func.func @transform_0(%arg0: i32) -> (i32, i32) {
    %c0_i32 = arith.constant 0 : i32
    %c0_i32_0 = arith.constant 0 : i32
    return %arg0, %c0_i32 : i32, i32
  }
  func.func @transform_1(%arg0: i32) -> (i32, i32) {
    %c0_i32 = arith.constant 0 : i32
    %c0_i32_0 = arith.constant 0 : i32
    %c0_i32_1 = arith.constant 0 : i32
    return %c0_i32, %c0_i32_0 : i32, i32
  }
  func.func @transform_2(%arg0: i32) -> (i32, i32) {
    %c0_i32 = arith.constant 0 : i32
    %c0_i32_0 = arith.constant 0 : i32
    %c0_i32_1 = arith.constant 0 : i32
    return %c0_i32, %c0_i32_0 : i32, i32
  }
  func.func @transform_3(%arg0: i32) -> (i32, i32) {
    %c0_i32 = arith.constant 0 : i32
    %c0_i32_0 = arith.constant 0 : i32
    %c0_i32_1 = arith.constant 0 : i32
    return %c0_i32, %c0_i32_0 : i32, i32
  }
  func.func @transform_4(%arg0: i32) -> (i32, i32) {
    %c0_i32 = arith.constant 0 : i32
    %c0_i32_0 = arith.constant 0 : i32
    %c0_i32_1 = arith.constant 0 : i32
    return %c0_i32, %c0_i32_0 : i32, i32
  }
  func.func @transform_5(%arg0: i32) -> (i32, i32) {
    %c0_i32 = arith.constant 0 : i32
    %c0_i32_0 = arith.constant 0 : i32
    return %arg0, %c0_i32 : i32, i32
  }
}

</mosaic_0001>

<llo_original>
// kernel: mlp_forward.1
$region0: #{mlp_forward.1}
  #allocation0 [shape = 'u32[]', space=smem, size = 0x4, offset = 0x4, fixed_abs, tag = 'smem constant byte address 0x4 - core index']
  #allocation1 [shape = 'u32[72,128]{1,0:T(1,128)}', space=vmem, size = 0x9000, scoped, tag = 'internal scratch']
  %s0 = inlined_call_operand.vmem [shape: f32[8,128], index: 0, kind: input, shape index: {}]
  %s1 = inlined_call_operand.vmem [shape: f32[128,256], index: 1, kind: input, shape index: {}]
  %s2 = inlined_call_operand.vmem [shape: f32[1,256], index: 2, kind: input, shape index: {}]
  %s3 = inlined_call_operand.vmem [shape: f32[256,512], index: 3, kind: input, shape index: {}]
  %s4 = inlined_call_operand.vmem [shape: f32[1,512], index: 4, kind: input, shape index: {}]
  %s5 = inlined_call_operand.hbm [shape: f32[8,512], index: 5, kind: output, shape index: {}]
  %s6 = sld [smem:[#allocation0]]
  $region30: #{mlp_forward.1} parent=0
    _
  %s8 = ssub.s32 1, %s6
  %s9 = scalar_select 0, %s8, %s6
  $region1: #{mlp_forward.1} parent=0
    #allocation2 [shape = 'u8[16384]{0}', space=vmem, size = 0x4000, scoped, tag = 'output window, operand 0, single buffered']
    #allocation3 [shape = 's32[1]{0}', space=sflag, size = 0x4, scoped, tag = 'scoped memory for mlp_forward.1']
    %10 = vsyncpa [#allocation3], 0
    // Predicated region
    $region2: #{mlp_forward.1} parent=1 // pred_check
      _
    $region3: #{mlp_forward.1} parent=1 // pred_check_branch
      %12 = sbr.rel (0) target = $region5
    $region4: #{mlp_forward.1} parent=1 // pred_region
      _
    $region5: #{mlp_forward.1} parent=1 // pred_fallthru
      _
    // Predicated region
    $region6: #{mlp_forward.1} parent=1 // pred_check
      _
    $region7: #{mlp_forward.1} parent=1 // pred_check_branch
      %14 = sbr.rel (0) target = $region9
    $region8: #{mlp_forward.1} parent=1 // pred_region
      _
    $region9: #{mlp_forward.1} parent=1 // pred_fallthru
      _
    // Predicated region
    $region10: #{mlp_forward.1} parent=1 // pred_check
      _
    $region11: #{mlp_forward.1} parent=1 // pred_check_branch
      %16 = sbr.rel (0) target = $region13
    $region12: #{mlp_forward.1} parent=1 // pred_region
      _
    $region13: #{mlp_forward.1} parent=1 // pred_fallthru
      _
    // Predicated region
    $region14: #{mlp_forward.1} parent=1 // pred_check
      _
    $region15: #{mlp_forward.1} parent=1 // pred_check_branch
      %18 = sbr.rel (0) target = $region17
    $region16: #{mlp_forward.1} parent=1 // pred_region
      _
    $region17: #{mlp_forward.1} parent=1 // pred_fallthru
      _
    // Predicated region
    $region18: #{mlp_forward.1} parent=1 // pred_check
      _
    $region19: #{mlp_forward.1} parent=1 // pred_check_branch
      %20 = sbr.rel (0) target = $region21
    $region20: #{mlp_forward.1} parent=1 // pred_region
      _
    $region21: #{mlp_forward.1} parent=1 // pred_fallthru
      _
    %v21 = vld [vmem:[%s0] sm:$0xff]
    %v22 = vld [vmem:[%s1] sm:$0xff]
    %v23 = vld [vmem:[%s1 + $0x8] sm:$0xff]
    %v24 = vld [vmem:[%s1 + $0x10] sm:$0xff]
    %v25 = vld [vmem:[%s1 + $0x18] sm:$0xff]
    %v26 = vld [vmem:[%s1 + $0x20] sm:$0xff]
    %v27 = vld [vmem:[%s1 + $0x28] sm:$0xff]
    %v28 = vld [vmem:[%s1 + $0x30] sm:$0xff]
    %v29 = vld [vmem:[%s1 + $0x38] sm:$0xff]
    %v30 = vld [vmem:[%s1 + $0x40] sm:$0xff]
    %v31 = vld [vmem:[%s1 + $0x48] sm:$0xff]
    %v32 = vld [vmem:[%s1 + $0x50] sm:$0xff]
    %v33 = vld [vmem:[%s1 + $0x58] sm:$0xff]
    %v34 = vld [vmem:[%s1 + $0x60] sm:$0xff]
    %v35 = vld [vmem:[%s1 + $0x68] sm:$0xff]
    %v36 = vld [vmem:[%s1 + $0x70] sm:$0xff]
    %v37 = vld [vmem:[%s1 + $0x78] sm:$0xff]
    %v38 = vld [vmem:[%s1 + $0x80] sm:$0xff]
    %v39 = vld [vmem:[%s1 + $0x88] sm:$0xff]
    %v40 = vld [vmem:[%s1 + $0x90] sm:$0xff]
    %v41 = vld [vmem:[%s1 + $0x98] sm:$0xff]
    %v42 = vld [vmem:[%s1 + $0xa0] sm:$0xff]
    %v43 = vld [vmem:[%s1 + $0xa8] sm:$0xff]
    %v44 = vld [vmem:[%s1 + $0xb0] sm:$0xff]
    %v45 = vld [vmem:[%s1 + $0xb8] sm:$0xff]
    %v46 = vld [vmem:[%s1 + $0xc0] sm:$0xff]
    %v47 = vld [vmem:[%s1 + $0xc8] sm:$0xff]
    %v48 = vld [vmem:[%s1 + $0xd0] sm:$0xff]
    %v49 = vld [vmem:[%s1 + $0xd8] sm:$0xff]
    %v50 = vld [vmem:[%s1 + $0xe0] sm:$0xff]
    %v51 = vld [vmem:[%s1 + $0xe8] sm:$0xff]
    %v52 = vld [vmem:[%s1 + $0xf0] sm:$0xff]
    %v53 = vld [vmem:[%s1 + $0xf8] sm:$0xff]
    %v54 = vld [vmem:[%s2] sm:$0x3]
    %v56 = vperm.slane %v54, 0
    %v57 = vperm.slane %v54, 1
    %60 = vmatpush.msra.mxu0 %v52
    %61 = vmatpush.msra.mxu0 %v50
    %62 = vmatpush.msra.mxu0 %v48
    %63 = vmatpush.msra.mxu0 %v46
    %64 = vmatpush.msra.mxu0 %v44
    %65 = vmatpush.msra.mxu0 %v42
    %66 = vmatpush.msra.mxu0 %v40
    %67 = vmatpush.msra.mxu0 %v38
    %68 = vmatpush.msra.mxu0 %v36
    %69 = vmatpush.msra.mxu0 %v34
    %70 = vmatpush.msra.mxu0 %v32
    %71 = vmatpush.msra.mxu0 %v30
    %72 = vmatpush.msra.mxu0 %v28
    %73 = vmatpush.msra.mxu0 %v26
    %74 = vmatpush.msra.mxu0 %v24
    %75 = vmatpush.msra.mxu0 %v22
    %76 = vmatmul.f32.gmra.mxu0 %v21
    %v77 = vpop.f32.mrf.mxu0
    %v78 = vadd.f32 %v56, %v77
    %79 = vdwg.mxu0
    %80 = vmatpush.msra.mxu0 %v53
    %81 = vmatpush.msra.mxu0 %v51
    %82 = vmatpush.msra.mxu0 %v49
    %83 = vmatpush.msra.mxu0 %v47
    %84 = vmatpush.msra.mxu0 %v45
    %85 = vmatpush.msra.mxu0 %v43
    %86 = vmatpush.msra.mxu0 %v41
    %87 = vmatpush.msra.mxu0 %v39
    %88 = vmatpush.msra.mxu0 %v37
    %89 = vmatpush.msra.mxu0 %v35
    %90 = vmatpush.msra.mxu0 %v33
    %91 = vmatpush.msra.mxu0 %v31
    %92 = vmatpush.msra.mxu0 %v29
    %93 = vmatpush.msra.mxu0 %v27
    %94 = vmatpush.msra.mxu0 %v25
    %95 = vmatpush.msra.mxu0 %v23
    %96 = vmatmul.f32.gmra.mxu0 %v21
    %v97 = vpop.f32.mrf.mxu0
    %v98 = vadd.f32 %v57, %v97
    %99 = vdwg.mxu0
    %v100 = vld [vmem:[%s3] sm:$0xff]
    %v101 = vld [vmem:[%s3 + $0x8] sm:$0xff]
    %v102 = vld [vmem:[%s3 + $0x10] sm:$0xff]
    %v103 = vld [vmem:[%s3 + $0x18] sm:$0xff]
    %v104 = vld [vmem:[%s3 + $0x20] sm:$0xff]
    %v105 = vld [vmem:[%s3 + $0x28] sm:$0xff]
    %v106 = vld [vmem:[%s3 + $0x30] sm:$0xff]
    %v107 = vld [vmem:[%s3 + $0x38] sm:$0xff]
    %v108 = vld [vmem:[%s3 + $0x40] sm:$0xff]
    %v109 = vld [vmem:[%s3 + $0x48] sm:$0xff]
    %v110 = vld [vmem:[%s3 + $0x50] sm:$0xff]
    %v111 = vld [vmem:[%s3 + $0x58] sm:$0xff]
    %v112 = vld [vmem:[%s3 + $0x60] sm:$0xff]
    %v113 = vld [vmem:[%s3 + $0x68] sm:$0xff]
    %v114 = vld [vmem:[%s3 + $0x70] sm:$0xff]
    %v115 = vld [vmem:[%s3 + $0x78] sm:$0xff]
    %v116 = vld [vmem:[%s3 + $0x80] sm:$0xff]
    %v117 = vld [vmem:[%s3 + $0x88] sm:$0xff]
    %v118 = vld [vmem:[%s3 + $0x90] sm:$0xff]
    %v119 = vld [vmem:[%s3 + $0x98] sm:$0xff]
    %v120 = vld [vmem:[%s3 + $0xa0] sm:$0xff]
    %v121 = vld [vmem:[%s3 + $0xa8] sm:$0xff]
    %v122 = vld [vmem:[%s3 + $0xb0] sm:$0xff]
    %v123 = vld [vmem:[%s3 + $0xb8] sm:$0xff]
    %v124 = vld [vmem:[%s3 + $0xc0] sm:$0xff]
    %v125 = vld [vmem:[%s3 + $0xc8] sm:$0xff]
    %v126 = vld [vmem:[%s3 + $0xd0] sm:$0xff]
    %v127 = vld [vmem:[%s3 + $0xd8] sm:$0xff]
    %v128 = vld [vmem:[%s3 + $0xe0] sm:$0xff]
    %v129 = vld [vmem:[%s3 + $0xe8] sm:$0xff]
    %v130 = vld [vmem:[%s3 + $0xf0] sm:$0xff]
    %v131 = vld [vmem:[%s3 + $0xf8] sm:$0xff]
    %v132 = vld [vmem:[%s3 + $0x100] sm:$0xff]
    %v133 = vld [vmem:[%s3 + $0x108] sm:$0xff]
    %v134 = vld [vmem:[%s3 + $0x110] sm:$0xff]
    %v135 = vld [vmem:[%s3 + $0x118] sm:$0xff]
    %v136 = vld [vmem:[%s3 + $0x120] sm:$0xff]
    %v137 = vld [vmem:[%s3 + $0x128] sm:$0xff]
    %v138 = vld [vmem:[%s3 + $0x130] sm:$0xff]
    %v139 = vld [vmem:[%s3 + $0x138] sm:$0xff]
    %v140 = vld [vmem:[%s3 + $0x140] sm:$0xff]
    %v141 = vld [vmem:[%s3 + $0x148] sm:$0xff]
    %v142 = vld [vmem:[%s3 + $0x150] sm:$0xff]
    %v143 = vld [vmem:[%s3 + $0x158] sm:$0xff]
    %v144 = vld [vmem:[%s3 + $0x160] sm:$0xff]
    %v145 = vld [vmem:[%s3 + $0x168] sm:$0xff]
    %v146 = vld [vmem:[%s3 + $0x170] sm:$0xff]
    %v147 = vld [vmem:[%s3 + $0x178] sm:$0xff]
    %v148 = vld [vmem:[%s3 + $0x180] sm:$0xff]
    %v149 = vld [vmem:[%s3 + $0x188] sm:$0xff]
    %v150 = vld [vmem:[%s3 + $0x190] sm:$0xff]
    %v151 = vld [vmem:[%s3 + $0x198] sm:$0xff]
    %v152 = vld [vmem:[%s3 + $0x1a0] sm:$0xff]
    %v153 = vld [vmem:[%s3 + $0x1a8] sm:$0xff]
    %v154 = vld [vmem:[%s3 + $0x1b0] sm:$0xff]
    %v155 = vld [vmem:[%s3 + $0x1b8] sm:$0xff]
    %v156 = vld [vmem:[%s3 + $0x1c0] sm:$0xff]
    %v157 = vld [vmem:[%s3 + $0x1c8] sm:$0xff]
    %v158 = vld [vmem:[%s3 + $0x1d0] sm:$0xff]
    %v159 = vld [vmem:[%s3 + $0x1d8] sm:$0xff]
    %v160 = vld [vmem:[%s3 + $0x1e0] sm:$0xff]
    %v161 = vld [vmem:[%s3 + $0x1e8] sm:$0xff]
    %v162 = vld [vmem:[%s3 + $0x1f0] sm:$0xff]
    %v163 = vld [vmem:[%s3 + $0x1f8] sm:$0xff]
    %v164 = vld [vmem:[%s3 + $0x200] sm:$0xff]
    %v165 = vld [vmem:[%s3 + $0x208] sm:$0xff]
    %v166 = vld [vmem:[%s3 + $0x210] sm:$0xff]
    %v167 = vld [vmem:[%s3 + $0x218] sm:$0xff]
    %v168 = vld [vmem:[%s3 + $0x220] sm:$0xff]
    %v169 = vld [vmem:[%s3 + $0x228] sm:$0xff]
    %v170 = vld [vmem:[%s3 + $0x230] sm:$0xff]
    %v171 = vld [vmem:[%s3 + $0x238] sm:$0xff]
    %v172 = vld [vmem:[%s3 + $0x240] sm:$0xff]
    %v173 = vld [vmem:[%s3 + $0x248] sm:$0xff]
    %v174 = vld [vmem:[%s3 + $0x250] sm:$0xff]
    %v175 = vld [vmem:[%s3 + $0x258] sm:$0xff]
    %v176 = vld [vmem:[%s3 + $0x260] sm:$0xff]
    %v177 = vld [vmem:[%s3 + $0x268] sm:$0xff]
    %v178 = vld [vmem:[%s3 + $0x270] sm:$0xff]
    %v179 = vld [vmem:[%s3 + $0x278] sm:$0xff]
    %v180 = vld [vmem:[%s3 + $0x280] sm:$0xff]
    %v181 = vld [vmem:[%s3 + $0x288] sm:$0xff]
    %v182 = vld [vmem:[%s3 + $0x290] sm:$0xff]
    %v183 = vld [vmem:[%s3 + $0x298] sm:$0xff]
    %v184 = vld [vmem:[%s3 + $0x2a0] sm:$0xff]
    %v185 = vld [vmem:[%s3 + $0x2a8] sm:$0xff]
    %v186 = vld [vmem:[%s3 + $0x2b0] sm:$0xff]
    %v187 = vld [vmem:[%s3 + $0x2b8] sm:$0xff]
    %v188 = vld [vmem:[%s3 + $0x2c0] sm:$0xff]
    %v189 = vld [vmem:[%s3 + $0x2c8] sm:$0xff]
    %v190 = vld [vmem:[%s3 + $0x2d0] sm:$0xff]
    %v191 = vld [vmem:[%s3 + $0x2d8] sm:$0xff]
    %v192 = vld [vmem:[%s3 + $0x2e0] sm:$0xff]
    %v193 = vld [vmem:[%s3 + $0x2e8] sm:$0xff]
    %v194 = vld [vmem:[%s3 + $0x2f0] sm:$0xff]
    %v195 = vld [vmem:[%s3 + $0x2f8] sm:$0xff]
    %v196 = vld [vmem:[%s3 + $0x300] sm:$0xff]
    %v197 = vld [vmem:[%s3 + $0x308] sm:$0xff]
    %v198 = vld [vmem:[%s3 + $0x310] sm:$0xff]
    %v199 = vld [vmem:[%s3 + $0x318] sm:$0xff]
    %v200 = vld [vmem:[%s3 + $0x320] sm:$0xff]
    %v201 = vld [vmem:[%s3 + $0x328] sm:$0xff]
    %v202 = vld [vmem:[%s3 + $0x330] sm:$0xff]
    %v203 = vld [vmem:[%s3 + $0x338] sm:$0xff]
    %v204 = vld [vmem:[%s3 + $0x340] sm:$0xff]
    %v205 = vld [vmem:[%s3 + $0x348] sm:$0xff]
    %v206 = vld [vmem:[%s3 + $0x350] sm:$0xff]
    %v207 = vld [vmem:[%s3 + $0x358] sm:$0xff]
    %v208 = vld [vmem:[%s3 + $0x360] sm:$0xff]
    %v209 = vld [vmem:[%s3 + $0x368] sm:$0xff]
    %v210 = vld [vmem:[%s3 + $0x370] sm:$0xff]
    %v211 = vld [vmem:[%s3 + $0x378] sm:$0xff]
    %v212 = vld [vmem:[%s3 + $0x380] sm:$0xff]
    %v213 = vld [vmem:[%s3 + $0x388] sm:$0xff]
    %v214 = vld [vmem:[%s3 + $0x390] sm:$0xff]
    %v215 = vld [vmem:[%s3 + $0x398] sm:$0xff]
    %v216 = vld [vmem:[%s3 + $0x3a0] sm:$0xff]
    %v217 = vld [vmem:[%s3 + $0x3a8] sm:$0xff]
    %v218 = vld [vmem:[%s3 + $0x3b0] sm:$0xff]
    %v219 = vld [vmem:[%s3 + $0x3b8] sm:$0xff]
    %v220 = vld [vmem:[%s3 + $0x3c0] sm:$0xff]
    %v221 = vld [vmem:[%s3 + $0x3c8] sm:$0xff]
    %v222 = vld [vmem:[%s3 + $0x3d0] sm:$0xff]
    %v223 = vld [vmem:[%s3 + $0x3d8] sm:$0xff]
    %v224 = vld [vmem:[%s3 + $0x3e0] sm:$0xff]
    %v225 = vld [vmem:[%s3 + $0x3e8] sm:$0xff]
    %v226 = vld [vmem:[%s3 + $0x3f0] sm:$0xff]
    %v227 = vld [vmem:[%s3 + $0x3f8] sm:$0xff]
    %v228 = vld [vmem:[%s4] sm:$0xf]
    %v230 = vperm.slane %v228, 0
    %v231 = vperm.slane %v228, 1
    %v232 = vperm.slane %v228, 2
    %v233 = vperm.slane %v228, 3
    %238 = vmatpush.msra.mxu0 %v160
    %239 = vmatpush.msra.mxu0 %v156
    %240 = vmatpush.msra.mxu0 %v152
    %241 = vmatpush.msra.mxu0 %v148
    %242 = vmatpush.msra.mxu0 %v144
    %243 = vmatpush.msra.mxu0 %v140
    %244 = vmatpush.msra.mxu0 %v136
    %245 = vmatpush.msra.mxu0 %v132
    %246 = vmatpush.msra.mxu0 %v128
    %247 = vmatpush.msra.mxu0 %v124
    %248 = vmatpush.msra.mxu0 %v120
    %249 = vmatpush.msra.mxu0 %v116
    %250 = vmatpush.msra.mxu0 %v112
    %251 = vmatpush.msra.mxu0 %v108
    %252 = vmatpush.msra.mxu0 %v104
    %253 = vmatpush.msra.mxu0 %v100
    %254 = vmatmul.f32.gmra.mxu0 %v78
    %v255 = vpop.f32.mrf.mxu0
    %v256 = vadd.f32 %v230, %v255
    %257 = vdwg.mxu0
    %258 = vmatpush.msra.mxu0 %v224
    %259 = vmatpush.msra.mxu0 %v220
    %260 = vmatpush.msra.mxu0 %v216
    %261 = vmatpush.msra.mxu0 %v212
    %262 = vmatpush.msra.mxu0 %v208
    %263 = vmatpush.msra.mxu0 %v204
    %264 = vmatpush.msra.mxu0 %v200
    %265 = vmatpush.msra.mxu0 %v196
    %266 = vmatpush.msra.mxu0 %v192
    %267 = vmatpush.msra.mxu0 %v188
    %268 = vmatpush.msra.mxu0 %v184
    %269 = vmatpush.msra.mxu0 %v180
    %270 = vmatpush.msra.mxu0 %v176
    %271 = vmatpush.msra.mxu0 %v172
    %272 = vmatpush.msra.mxu0 %v168
    %273 = vmatpush.msra.mxu0 %v164
    %274 = vmatmul.f32.gmra.mxu0 %v98
    %v275 = vpop.f32.mrf.mxu0
    %v276 = vadd.f32 %v256, %v275
    %277 = vdwg.mxu0
    %278 = vmatpush.msra.mxu0 %v161
    %279 = vmatpush.msra.mxu0 %v157
    %280 = vmatpush.msra.mxu0 %v153
    %281 = vmatpush.msra.mxu0 %v149
    %282 = vmatpush.msra.mxu0 %v145
    %283 = vmatpush.msra.mxu0 %v141
    %284 = vmatpush.msra.mxu0 %v137
    %285 = vmatpush.msra.mxu0 %v133
    %286 = vmatpush.msra.mxu0 %v129
    %287 = vmatpush.msra.mxu0 %v125
    %288 = vmatpush.msra.mxu0 %v121
    %289 = vmatpush.msra.mxu0 %v117
    %290 = vmatpush.msra.mxu0 %v113
    %291 = vmatpush.msra.mxu0 %v109
    %292 = vmatpush.msra.mxu0 %v105
    %293 = vmatpush.msra.mxu0 %v101
    %294 = vmatmul.f32.gmra.mxu0 %v78
    %v295 = vpop.f32.mrf.mxu0
    %v296 = vadd.f32 %v231, %v295
    %297 = vdwg.mxu0
    %298 = vmatpush.msra.mxu0 %v225
    %299 = vmatpush.msra.mxu0 %v221
    %300 = vmatpush.msra.mxu0 %v217
    %301 = vmatpush.msra.mxu0 %v213
    %302 = vmatpush.msra.mxu0 %v209
    %303 = vmatpush.msra.mxu0 %v205
    %304 = vmatpush.msra.mxu0 %v201
    %305 = vmatpush.msra.mxu0 %v197
    %306 = vmatpush.msra.mxu0 %v193
    %307 = vmatpush.msra.mxu0 %v189
    %308 = vmatpush.msra.mxu0 %v185
    %309 = vmatpush.msra.mxu0 %v181
    %310 = vmatpush.msra.mxu0 %v177
    %311 = vmatpush.msra.mxu0 %v173
    %312 = vmatpush.msra.mxu0 %v169
    %313 = vmatpush.msra.mxu0 %v165
    %314 = vmatmul.f32.gmra.mxu0 %v98
    %v315 = vpop.f32.mrf.mxu0
    %v316 = vadd.f32 %v296, %v315
    %317 = vdwg.mxu0
    %318 = vmatpush.msra.mxu0 %v162
    %319 = vmatpush.msra.mxu0 %v158
    %320 = vmatpush.msra.mxu0 %v154
    %321 = vmatpush.msra.mxu0 %v150
    %322 = vmatpush.msra.mxu0 %v146
    %323 = vmatpush.msra.mxu0 %v142
    %324 = vmatpush.msra.mxu0 %v138
    %325 = vmatpush.msra.mxu0 %v134
    %326 = vmatpush.msra.mxu0 %v130
    %327 = vmatpush.msra.mxu0 %v126
    %328 = vmatpush.msra.mxu0 %v122
    %329 = vmatpush.msra.mxu0 %v118
    %330 = vmatpush.msra.mxu0 %v114
    %331 = vmatpush.msra.mxu0 %v110
    %332 = vmatpush.msra.mxu0 %v106
    %333 = vmatpush.msra.mxu0 %v102
    %334 = vmatmul.f32.gmra.mxu0 %v78
    %v335 = vpop.f32.mrf.mxu0
    %v336 = vadd.f32 %v232, %v335
    %337 = vdwg.mxu0
    %338 = vmatpush.msra.mxu0 %v226
    %339 = vmatpush.msra.mxu0 %v222
    %340 = vmatpush.msra.mxu0 %v218
    %341 = vmatpush.msra.mxu0 %v214
    %342 = vmatpush.msra.mxu0 %v210
    %343 = vmatpush.msra.mxu0 %v206
    %344 = vmatpush.msra.mxu0 %v202
    %345 = vmatpush.msra.mxu0 %v198
    %346 = vmatpush.msra.mxu0 %v194
    %347 = vmatpush.msra.mxu0 %v190
    %348 = vmatpush.msra.mxu0 %v186
    %349 = vmatpush.msra.mxu0 %v182
    %350 = vmatpush.msra.mxu0 %v178
    %351 = vmatpush.msra.mxu0 %v174
    %352 = vmatpush.msra.mxu0 %v170
    %353 = vmatpush.msra.mxu0 %v166
    %354 = vmatmul.f32.gmra.mxu0 %v98
    %v355 = vpop.f32.mrf.mxu0
    %v356 = vadd.f32 %v336, %v355
    %357 = vdwg.mxu0
    %358 = vmatpush.msra.mxu0 %v163
    %359 = vmatpush.msra.mxu0 %v159
    %360 = vmatpush.msra.mxu0 %v155
    %361 = vmatpush.msra.mxu0 %v151
    %362 = vmatpush.msra.mxu0 %v147
    %363 = vmatpush.msra.mxu0 %v143
    %364 = vmatpush.msra.mxu0 %v139
    %365 = vmatpush.msra.mxu0 %v135
    %366 = vmatpush.msra.mxu0 %v131
    %367 = vmatpush.msra.mxu0 %v127
    %368 = vmatpush.msra.mxu0 %v123
    %369 = vmatpush.msra.mxu0 %v119
    %370 = vmatpush.msra.mxu0 %v115
    %371 = vmatpush.msra.mxu0 %v111
    %372 = vmatpush.msra.mxu0 %v107
    %373 = vmatpush.msra.mxu0 %v103
    %374 = vmatmul.f32.gmra.mxu0 %v78
    %v375 = vpop.f32.mrf.mxu0
    %v376 = vadd.f32 %v233, %v375
    %377 = vdwg.mxu0
    %378 = vmatpush.msra.mxu0 %v227
    %379 = vmatpush.msra.mxu0 %v223
    %380 = vmatpush.msra.mxu0 %v219
    %381 = vmatpush.msra.mxu0 %v215
    %382 = vmatpush.msra.mxu0 %v211
    %383 = vmatpush.msra.mxu0 %v207
    %384 = vmatpush.msra.mxu0 %v203
    %385 = vmatpush.msra.mxu0 %v199
    %386 = vmatpush.msra.mxu0 %v195
    %387 = vmatpush.msra.mxu0 %v191
    %388 = vmatpush.msra.mxu0 %v187
    %389 = vmatpush.msra.mxu0 %v183
    %390 = vmatpush.msra.mxu0 %v179
    %391 = vmatpush.msra.mxu0 %v175
    %392 = vmatpush.msra.mxu0 %v171
    %393 = vmatpush.msra.mxu0 %v167
    %394 = vmatmul.f32.gmra.mxu0 %v98
    %v395 = vpop.f32.mrf.mxu0
    %v396 = vadd.f32 %v376, %v395
    %397 = vdwg.mxu0
    %398 = vst [vmem:[#allocation2] sm:$0xff] %v276
    %399 = vst [vmem:[#allocation2 + $0x8] sm:$0xff] %v316
    %400 = vst [vmem:[#allocation2 + $0x10] sm:$0xff] %v356
    %401 = vst [vmem:[#allocation2 + $0x18] sm:$0xff] %v396
    // Predicated region
    $region22: #{mlp_forward.1} parent=1 // pred_check
      _
    $region23: #{mlp_forward.1} parent=1 // pred_check_branch
      %403 = sbr.rel (0) target = $region25
    $region24: #{mlp_forward.1} parent=1 // pred_region
      %405 = vsyncadd [#allocation3], 0
      %s407 = sshll.u32 [#allocation2], 4
      %s408 = int_to_ptr.vmem [resolvable:$true] %s407
      %s409 = sshll.u32 %s5, 4
      %s410 = int_to_ptr.hbm [resolvable:$true] %s409
      %412 = dma.vmem_to_hbm [thread:$0]  %s408, 512, %s410, [#allocation3]
    $region25: #{mlp_forward.1} parent=1 // pred_fallthru
      _
    // Predicated region
    $region26: #{mlp_forward.1} parent=1 // pred_check
      _
    $region27: #{mlp_forward.1} parent=1 // pred_check_branch
      %414 = sbr.rel (0) target = $region29
    $region28: #{mlp_forward.1} parent=1 // pred_region
      %416 = dma.done [#allocation3], 512
    $region29: #{mlp_forward.1} parent=1 // pred_fallthru
      _
    %417 = vsyncpa [#allocation3], 1

</llo_original>
